<compile_context>
chip_gen: v7x
topology: tpu7x:2x2x1
jax: 0.10.0
libtpu: 0.0.40
codegen_flags: <defaults>
</compile_context>

<pallas_src>
import functools

import numpy as np
import jax
import jax.numpy as jnp
from jax.experimental import pallas as pl
from jax.experimental.pallas import tpu as pltpu


def _ceil_div(a, b):
    return -(-a // b)


# -----------------------------------------------------------------------------
# Host-side Hungarian algorithm (linear_sum_assignment replacement).
# TODO(synk): the Hungarian assignment is an inherently sequential, data-dependent
# host algorithm with no clean Pallas equivalent; it runs in numpy on the cost
# matrix produced by the Pallas kernel.
# -----------------------------------------------------------------------------
def _hungarian_square(cost):
    n = cost.shape[0]
    INF = float("inf")
    u = [0.0] * (n + 1)
    v = [0.0] * (n + 1)
    p = [0] * (n + 1)
    way = [0] * (n + 1)
    for i in range(1, n + 1):
        p[0] = i
        j0 = 0
        minv = [INF] * (n + 1)
        used = [False] * (n + 1)
        while True:
            used[j0] = True
            i0 = p[j0]
            delta = INF
            j1 = 0
            for j in range(1, n + 1):
                if not used[j]:
                    cur = float(cost[i0 - 1, j - 1]) - u[i0] - v[j]
                    if cur < minv[j]:
                        minv[j] = cur
                        way[j] = j0
                    if minv[j] < delta:
                        delta = minv[j]
                        j1 = j
            for j in range(n + 1):
                if used[j]:
                    u[p[j]] += delta
                    v[j] -= delta
                else:
                    minv[j] -= delta
            j0 = j1
            if p[j0] == 0:
                break
        while j0 != 0:
            j1 = way[j0]
            p[j0] = p[j1]
            j0 = j1
    return [p[j] - 1 for j in range(1, n + 1)]  # row assigned to column j


def linear_sum_assignment_np(C):
    Q, T = C.shape
    n = max(Q, T)
    sq = np.zeros((n, n), dtype=np.float64)
    sq[:Q, :T] = np.asarray(C, dtype=np.float64)
    row_for_col = _hungarian_square(sq)
    pairs = [(row_for_col[j], j) for j in range(T)
             if row_for_col[j] < Q and j < T]
    pairs.sort()
    rows = np.array([r for r, _ in pairs], dtype=np.int64)
    cols = np.array([c for _, c in pairs], dtype=np.int64)
    return rows, cols


# -----------------------------------------------------------------------------
# Pallas kernel 1: matcher cost matrix.  One fused class-gather matmul per
# batch block + lane-major pairwise L1 regression cost.
# -----------------------------------------------------------------------------
def _cost_kernel(x_ref, w_ref, pr_ref, tr_ref, c_ref,
                 *, cn, ci, cp, wn, wi, wp, wr, use_softmax):
    x = x_ref[...].astype(jnp.float32)           # (Bb, Qp, K)  K = Cn+Ci+Cp
    w = w_ref[...]                               # (Bb, K, Tp)  -weights folded in
    # single fused class-gather matmul: cost[b,q,t] = -sum_h w_h * x_h[b,q,c_h(t)]
    cost = jnp.einsum("bqk,bkt->bqt", x, w, preferred_element_type=jnp.float32)

    if use_softmax:
        # log_softmax(x) = x - lse(x); the -x part is already in the matmul, so
        # add back  +sum_h w_h * lse_h(q)  as a per-query column correction.
        def lse(z):
            m = jnp.max(z, axis=-1, keepdims=True)
            return jnp.log(jnp.sum(jnp.exp(z - m), axis=-1, keepdims=True)) + m
        corr = (wn * lse(x[..., :cn])
                + wi * lse(x[..., cn:cn + ci])
                + wp * lse(x[..., cn + ci:cn + ci + cp]))   # (Bb, Qp, 1)
        cost = cost + corr

    # pairwise L1 regression cost; targets are lane-major (Bb, 3, Tp) so each
    # term is a pure VPU broadcast-subtract.
    pr = pr_ref[...].astype(jnp.float32)         # (Bb, Qp, 3)
    tr = tr_ref[...]                             # (Bb, 3, Tp)
    reg = jnp.abs(pr[:, :, 0:1] - tr[:, 0:1, :])
    reg = reg + jnp.abs(pr[:, :, 1:2] - tr[:, 1:2, :])
    reg = reg + jnp.abs(pr[:, :, 2:3] - tr[:, 2:3, :])

    c_ref[...] = cost + wr * reg


def compute_cost_matrices(pred_note, pred_inst, pred_pitch, pred_reg,
                          tgt_note, tgt_inst, tgt_pitch, t_start, t_dur, t_vel,
                          wn, wi, wp, wr, use_softmax):
    B, Q, Cn = pred_note.shape
    Ci = pred_inst.shape[-1]
    Cp = pred_pitch.shape[-1]
    T = tgt_note.shape[-1]
    K = Cn + Ci + Cp

    # Batch blocking: at most 2 grid steps ("parallel" -> both TCs on v7x),
    # capped block size so VMEM stays bounded for large B.
    n_blocks = 2 if B >= 2 else 1
    B_blk = min(_ceil_div(B, n_blocks), 8)
    n_blocks = _ceil_div(B, B_blk)
    B_pad = n_blocks * B_blk
    Q_pad = _ceil_div(Q, 8) * 8
    T_pad = _ceil_div(T, 128) * 128              # lane-dense output stores

    # Concatenated class logits (keep model dtype; upcast in-kernel).
    x = jnp.concatenate([pred_note, pred_inst, pred_pitch], axis=-1)
    x = jnp.pad(x, ((0, B_pad - B), (0, Q_pad - Q), (0, 0)))

    # Pre-transposed one-hot (B, K, T_pad) with -weight folded in; padded target
    # columns use class -1 => all-zero columns (sliced off before Hungarian).
    def neg_w_onehot(tgt, C, w):
        tgt_p = jnp.pad(tgt.astype(jnp.int32),
                        ((0, B_pad - B), (0, T_pad - T)), constant_values=-1)
        cls = jnp.arange(C, dtype=jnp.int32)[None, :, None]       # (1, C, 1)
        return (tgt_p[:, None, :] == cls).astype(jnp.float32) * (-float(w))

    W = jnp.concatenate([neg_w_onehot(tgt_note, Cn, wn),
                         neg_w_onehot(tgt_inst, Ci, wi),
                         neg_w_onehot(tgt_pitch, Cp, wp)], axis=1)  # (B_pad,K,T_pad)

    pr = jnp.pad(pred_reg, ((0, B_pad - B), (0, Q_pad - Q), (0, 0)))
    tr = jnp.stack([t_start, t_dur, t_vel], axis=1).astype(jnp.float32)  # (B,3,T)
    tr = jnp.pad(tr, ((0, B_pad - B), (0, 0), (0, T_pad - T)))

    kernel = functools.partial(_cost_kernel, cn=Cn, ci=Ci, cp=Cp,
                               wn=float(wn), wi=float(wi), wp=float(wp),
                               wr=float(wr), use_softmax=bool(use_softmax))
    spec3 = lambda d1, d2: pl.BlockSpec((B_blk, d1, d2), lambda i: (i, 0, 0))

    C_full = pl.pallas_call(
        kernel,
        out_shape=jax.ShapeDtypeStruct((B_pad, Q_pad, T_pad), jnp.float32),
        grid=(n_blocks,),
        in_specs=[spec3(Q_pad, K), spec3(K, T_pad), spec3(Q_pad, 3), spec3(3, T_pad)],
        out_specs=spec3(Q_pad, T_pad),
        compiler_params=pltpu.CompilerParams(dimension_semantics=("parallel",)),
    )(x, W, pr, tr)

    # Slice padded queries / targets before the Hungarian (phantom rows/cols
    # must never reach the matcher).
    return C_full[:B, :Q, :T]


# -----------------------------------------------------------------------------
# Pallas kernel 2: fused losses — three mean cross-entropies (one-hots built
# in-kernel from int32 labels via iota compare) + masked regression statistics.
# One launch, six small outputs.
# -----------------------------------------------------------------------------
def _loss_kernel(note_ref, inst_ref, pitch_ref, lab_ref, pr_ref, tr_ref, m_ref,
                 ce_n_ref, ce_i_ref, ce_p_ref, abs_ref, sq_ref, cnt_ref):
    labels = lab_ref[...]                                   # (N, 3) int32

    def ce_mean(logits_ref, lab_col):
        x = logits_ref[...].astype(jnp.float32)             # (N, C)
        n, c = x.shape
        mx = jnp.max(x, axis=-1, keepdims=True)
        lse = jnp.log(jnp.sum(jnp.exp(x - mx), axis=-1, keepdims=True)) + mx
        oh = lab_col == jax.lax.broadcasted_iota(jnp.int32, (n, c), 1)
        picked = jnp.sum(jnp.where(oh, x, 0.0), axis=-1, keepdims=True)
        return jnp.sum(lse - picked, axis=0, keepdims=True) * (1.0 / n)

    ce_n_ref[...] = ce_mean(note_ref, labels[:, 0:1])
    ce_i_ref[...] = ce_mean(inst_ref, labels[:, 1:2])
    ce_p_ref[...] = ce_mean(pitch_ref, labels[:, 2:3])

    d = pr_ref[...].astype(jnp.float32) - tr_ref[...]       # (N, 3)
    m = m_ref[...]                                          # (N, 1)
    abs_ref[...] = jnp.sum(m * jnp.abs(d), axis=0, keepdims=True)   # (1, 3)
    sq_ref[...] = jnp.sum(m * d * d, axis=0, keepdims=True)         # (1, 3)
    cnt_ref[...] = jnp.sum(m, axis=0, keepdims=True)                # (1, 1)


def fused_losses(note_logits, inst_logits, pitch_logits, labels,
                 pred_reg, tgt_reg, mask):
    N, Cn = note_logits.shape
    Ci = inst_logits.shape[-1]
    Cp = pitch_logits.shape[-1]

    full = lambda s: pl.BlockSpec(s, lambda i: tuple(0 for _ in s))
    return pl.pallas_call(
        _loss_kernel,
        out_shape=(jax.ShapeDtypeStruct((1, 1), jnp.float32),
                   jax.ShapeDtypeStruct((1, 1), jnp.float32),
                   jax.ShapeDtypeStruct((1, 1), jnp.float32),
                   jax.ShapeDtypeStruct((1, 3), jnp.float32),
                   jax.ShapeDtypeStruct((1, 3), jnp.float32),
                   jax.ShapeDtypeStruct((1, 1), jnp.float32)),
        grid=(1,),
        in_specs=[full((N, Cn)), full((N, Ci)), full((N, Cp)),
                  full((N, 3)), full((N, 3)), full((N, 3)), full((N, 1))],
        out_specs=(full((1, 1)), full((1, 1)), full((1, 1)),
                   full((1, 3)), full((1, 3)), full((1, 1))),
    )(note_logits, inst_logits, pitch_logits, labels, pred_reg, tgt_reg, mask)


# -----------------------------------------------------------------------------
# Host-side metric glue (dynamic-size matched sets; mirrors torch reference).
# Works on argmax labels only, so the full logits never leave the device.
# -----------------------------------------------------------------------------
def compute_metrics_np(pred_labels, tgt_classes, num_classes, epsilon=1e-7):
    if pred_labels.size == 0:
        return 0.0, 0.0
    correct = float(np.sum(pred_labels == tgt_classes))
    total = tgt_classes.shape[0]
    accuracy = correct / (total + epsilon)
    f1_scores = []
    for cls in range(num_classes):
        tp = float(np.sum((pred_labels == cls) & (tgt_classes == cls)))
        pp = float(np.sum(pred_labels == cls))
        ap = float(np.sum(tgt_classes == cls))
        precision = tp / (pp + epsilon)
        recall = tp / (ap + epsilon)
        f1 = 2 * precision * recall / (precision + recall + epsilon)
        f1_scores.append(f1)
    min_f1 = min(f1_scores) if f1_scores else 0.0
    return accuracy, min_f1


# -----------------------------------------------------------------------------
# CustomCriterion (JAX / Pallas version)
# -----------------------------------------------------------------------------
class CustomCriterion:
    def __init__(self, config):
        self.w_note = config.get("cost_note_type", 1)
        self.w_inst = config.get("cost_instrument", 1)
        self.w_pitch = config.get("cost_pitch", 1)
        self.w_reg = config.get("cost_regression", 1)
        self.use_softmax = config.get("loss", {}).get("use_softmax", False)
        self.num_note_types = config["num_classes"]["note_type"]
        self.num_instruments = config["num_classes"]["instrument"]
        self.num_pitches = config["num_classes"]["pitch"]
        self.loss_weights = {"note_type": self.w_note, "instrument": self.w_inst,
                             "pitch": self.w_pitch, "regression": self.w_reg}

    # ---- matcher -------------------------------------------------------------
    def match(self, outputs, targets):
        B = outputs["pred_note_type"].shape[0]
        T = targets["note_type"].shape[-1]
        if T == 0:
            return [(np.empty(0, np.int64), np.empty(0, np.int64)) for _ in range(B)]
        C = compute_cost_matrices(
            outputs["pred_note_type"], outputs["pred_instrument"],
            outputs["pred_pitch"], outputs["pred_regression"],
            targets["note_type"], targets["instrument"], targets["pitch"],
            targets["start_time"], targets["duration"], targets["velocity"],
            self.w_note, self.w_inst, self.w_pitch, self.w_reg, self.use_softmax)
        C_np = np.asarray(C)          # only the small (B, Q, T) cost hits the host
        indices = []
        for b in range(B):
            row, col = linear_sum_assignment_np(C_np[b])
            indices.append((row, col))
        return indices

    # ---- full forward --------------------------------------------------------
    def __call__(self, outputs, targets):
        indices = self.match(outputs, targets)

        pred_note_d = outputs["pred_note_type"]        # stays on device
        pred_inst_d = outputs["pred_instrument"]
        pred_pitch_d = outputs["pred_pitch"]
        pred_reg_d = outputs["pred_regression"]
        B, Q, Cn = pred_note_d.shape
        Ci = pred_inst_d.shape[-1]
        Cp = pred_pitch_d.shape[-1]

        # Small host-side target tables (reference semantics: unmatched note/inst
        # -> class 0, unmatched pitch -> last class, exactly as in the PyTorch
        # reference — this asymmetry is intentional).
        t_note = np.asarray(targets["note_type"])
        t_inst = np.asarray(targets["instrument"])
        t_pitch = np.asarray(targets["pitch"])
        t_start = np.asarray(targets["start_time"])
        t_dur = np.asarray(targets["duration"])
        t_vel = np.asarray(targets["velocity"])

        tgt_note_cls = np.zeros((B, Q), dtype=np.int32)
        tgt_inst_cls = np.zeros((B, Q), dtype=np.int32)
        tgt_pitch_cls = np.full((B, Q), Cp - 1, dtype=np.int32)
        tgt_reg_full = np.zeros((B, Q, 3), dtype=np.float32)
        match_mask = np.zeros((B, Q), dtype=np.float32)

        for b, (pidx, tidx) in enumerate(indices):
            if len(pidx) == 0:
                continue
            tgt_note_cls[b, pidx] = t_note[b][tidx]
            tgt_inst_cls[b, pidx] = t_inst[b][tidx]
            tgt_pitch_cls[b, pidx] = t_pitch[b][tidx]
            tgt_reg_full[b, pidx] = np.stack(
                [t_start[b][tidx], t_dur[b][tidx], t_vel[b][tidx]], axis=-1)
            match_mask[b, pidx] = 1.0

        labels = jnp.asarray(
            np.stack([tgt_note_cls, tgt_inst_cls, tgt_pitch_cls],
                     axis=-1).reshape(-1, 3).astype(np.int32))

        # --- single fused Pallas launch: 3x CE + masked regression stats ---
        ce_n, ce_i, ce_p, abs_sums, sq_sums, cnt = fused_losses(
            pred_note_d.reshape(-1, Cn),
            pred_inst_d.reshape(-1, Ci),
            pred_pitch_d.reshape(-1, Cp),
            labels,
            pred_reg_d.reshape(-1, 3),
            jnp.asarray(tgt_reg_full.reshape(-1, 3)),
            jnp.asarray(match_mask.reshape(-1, 1)))

        count = cnt[0, 0]
        has_match = count > 0
        loss_reg = jnp.where(has_match, jnp.sum(abs_sums) / (3.0 * count), 0.0)
        mse_start = jnp.where(has_match, sq_sums[0, 0] / count, 0.0)
        mse_dur = jnp.where(has_match, sq_sums[0, 1] / count, 0.0)
        mse_vel = jnp.where(has_match, sq_sums[0, 2] / count, 0.0)

        losses = {
            "loss_note_type": self.loss_weights["note_type"] * ce_n[0, 0],
            "loss_instrument": self.loss_weights["instrument"] * ce_i[0, 0],
            "loss_pitch": self.loss_weights["pitch"] * ce_p[0, 0],
            "loss_regression": self.loss_weights["regression"] * loss_reg,
        }

        # --- debug metrics: only (B, Q) argmax labels cross to host ---
        note_lab = np.asarray(jnp.argmax(pred_note_d, axis=-1))
        inst_lab = np.asarray(jnp.argmax(pred_inst_d, axis=-1))
        pit_lab = np.asarray(jnp.argmax(pred_pitch_d, axis=-1))

        pn_m, tn_m, pi_m, ti_m, pp_m, tp_m = [], [], [], [], [], []
        for b, (pidx, tidx) in enumerate(indices):
            if len(pidx) == 0:
                continue
            pn_m.append(note_lab[b][pidx]); tn_m.append(t_note[b][tidx])
            pi_m.append(inst_lab[b][pidx]); ti_m.append(t_inst[b][tidx])
            pp_m.append(pit_lab[b][pidx]); tp_m.append(t_pitch[b][tidx])

        def _cat(lst):
            return np.concatenate(lst, axis=0) if lst else np.zeros((0,), np.int64)

        note_acc, note_min_f1 = compute_metrics_np(_cat(pn_m), _cat(tn_m), Cn)
        inst_acc, inst_min_f1 = compute_metrics_np(_cat(pi_m), _cat(ti_m), Ci)
        pit_acc, pit_min_f1 = compute_metrics_np(_cat(pp_m), _cat(tp_m), Cp)

        debuginfo = {
            "note_acc": jnp.float32(note_acc), "NoteMinF1": jnp.float32(note_min_f1),
            "InstAcc": jnp.float32(inst_acc), "InstMinF1": jnp.float32(inst_min_f1),
            "pit_acc": jnp.float32(pit_acc), "pit_MF1": jnp.float32(pit_min_f1),
            "R_M_ST": mse_start, "R_M_dur": mse_dur, "R_M_v": mse_vel,
        }
        return losses, debuginfo


# -----------------------------------------------------------------------------
# Demo
# -----------------------------------------------------------------------------
if __name__ == "__main__":
    config = {"num_classes": {"note_type": 3, "instrument": 4, "pitch": 5}}
    criterion = CustomCriterion(config)

    B, Q, T = 2, 8, 4
    Cn, Ci, Cp = 3 + 1, 4 + 1, 5 + 1

    key = jax.random.PRNGKey(0)
    keys = jax.random.split(key, 10)
    outputs = {
        "pred_note_type": jax.random.normal(keys[0], (B, Q, Cn), jnp.float32),
        "pred_instrument": jax.random.normal(keys[1], (B, Q, Ci), jnp.float32),
        "pred_pitch": jax.random.normal(keys[2], (B, Q, Cp), jnp.float32),
        "pred_regression": jax.random.normal(keys[3], (B, Q, 3), jnp.float32),
    }
    targets = {
        "note_type": jax.random.randint(keys[4], (B, T), 0, Cn),
        "instrument": jax.random.randint(keys[5], (B, T), 0, Ci),
        "pitch": jax.random.randint(keys[6], (B, T), 0, Cp - 1),
        "start_time": jax.random.uniform(keys[7], (B, T), jnp.float32),
        "duration": jax.random.uniform(keys[8], (B, T), jnp.float32),
        "velocity": jax.random.uniform(keys[9], (B, T), jnp.float32),
    }

    losses, debuginfo = criterion(outputs, targets)
    jax.block_until_ready(losses)
    jax.block_until_ready(debuginfo)
    print("KERNEL_OK")
</pallas_src>

<mosaic_0001>
module attributes {stable_mosaic.version = 11 : i64} {
  func.func @_cost_kernel(%arg0: i32, %arg1: memref<1x8x15xf32, #tpu.memory_space<vmem>>, %arg2: memref<1x15x128xf32, #tpu.memory_space<vmem>>, %arg3: memref<1x8x3xf32, #tpu.memory_space<vmem>>, %arg4: memref<1x3x128xf32, #tpu.memory_space<vmem>>, %arg5: memref<1x8x128xf32, #tpu.memory_space<vmem>>) attributes {dimension_semantics = [#tpu.dimension_semantics<parallel>], iteration_bounds = array<i64: 2>, scalar_prefetch = 0 : i64, scratch_operands = 0 : i64, tpu.core_type = #tpu.core_type<tc>, window_params = [{transform_indices = @transform_0, window_bounds = array<i64: 1, 8, 15>}, {transform_indices = @transform_1, window_bounds = array<i64: 1, 15, 128>}, {transform_indices = @transform_2, window_bounds = array<i64: 1, 8, 3>}, {transform_indices = @transform_3, window_bounds = array<i64: 1, 3, 128>}, {transform_indices = @transform_4, window_bounds = array<i64: 1, 8, 128>}]} {
    %c0 = arith.constant 0 : index
    %c0_0 = arith.constant 0 : index
    %c0_1 = arith.constant 0 : index
    %0 = vector.load %arg1[%c0, %c0_0, %c0_1] : memref<1x8x15xf32, #tpu.memory_space<vmem>>, vector<1x8x15xf32>
    %c0_2 = arith.constant 0 : index
    %c0_3 = arith.constant 0 : index
    %c0_4 = arith.constant 0 : index
    %1 = vector.load %arg2[%c0_2, %c0_3, %c0_4] : memref<1x15x128xf32, #tpu.memory_space<vmem>>, vector<1x15x128xf32>
    "tpu.trace_start"() <{level = 10 : i32, message = "bqk,bkt->bqt"}> : () -> ()
    %cst = arith.constant dense<0.000000e+00> : vector<1x8x128xf32>
    %2 = tpu.matmul %0, %1, %cst {dimension_numbers = #tpu.dot_dimension_numbers<[2], [1], [1], [2], [0, 0, 0, 1, 1, 2], [0], [0]>} : vector<1x8x15xf32>, vector<1x15x128xf32>, vector<1x8x128xf32> -> vector<1x8x128xf32>
    "tpu.trace_stop"() : () -> ()
    %c0_5 = arith.constant 0 : index
    %c0_6 = arith.constant 0 : index
    %c0_7 = arith.constant 0 : index
    %3 = vector.load %arg3[%c0_5, %c0_6, %c0_7] : memref<1x8x3xf32, #tpu.memory_space<vmem>>, vector<1x8x3xf32>
    %c0_8 = arith.constant 0 : index
    %c0_9 = arith.constant 0 : index
    %c0_10 = arith.constant 0 : index
    %4 = vector.load %arg4[%c0_8, %c0_9, %c0_10] : memref<1x3x128xf32, #tpu.memory_space<vmem>>, vector<1x3x128xf32>
    %5 = vector.extract_strided_slice %3 {offsets = [0, 0, 0], sizes = [1, 8, 1], strides = [1, 1, 1]} : vector<1x8x3xf32> to vector<1x8x1xf32>
    %6 = vector.extract_strided_slice %4 {offsets = [0, 0, 0], sizes = [1, 1, 128], strides = [1, 1, 1]} : vector<1x3x128xf32> to vector<1x1x128xf32>
    %7 = vector.broadcast %5 : vector<1x8x1xf32> to vector<1x8x128xf32>
    %8 = vector.broadcast %6 : vector<1x1x128xf32> to vector<1x8x128xf32>
    %9 = arith.subf %7, %8 : vector<1x8x128xf32>
    %10 = math.absf %9 : vector<1x8x128xf32>
    %11 = vector.extract_strided_slice %3 {offsets = [0, 0, 1], sizes = [1, 8, 1], strides = [1, 1, 1]} : vector<1x8x3xf32> to vector<1x8x1xf32>
    %12 = vector.extract_strided_slice %4 {offsets = [0, 1, 0], sizes = [1, 1, 128], strides = [1, 1, 1]} : vector<1x3x128xf32> to vector<1x1x128xf32>
    %13 = vector.broadcast %11 : vector<1x8x1xf32> to vector<1x8x128xf32>
    %14 = vector.broadcast %12 : vector<1x1x128xf32> to vector<1x8x128xf32>
    %15 = arith.subf %13, %14 : vector<1x8x128xf32>
    %16 = math.absf %15 : vector<1x8x128xf32>
    %17 = arith.addf %10, %16 : vector<1x8x128xf32>
    %18 = vector.extract_strided_slice %3 {offsets = [0, 0, 2], sizes = [1, 8, 1], strides = [1, 1, 1]} : vector<1x8x3xf32> to vector<1x8x1xf32>
    %19 = vector.extract_strided_slice %4 {offsets = [0, 2, 0], sizes = [1, 1, 128], strides = [1, 1, 1]} : vector<1x3x128xf32> to vector<1x1x128xf32>
    %20 = vector.broadcast %18 : vector<1x8x1xf32> to vector<1x8x128xf32>
    %21 = vector.broadcast %19 : vector<1x1x128xf32> to vector<1x8x128xf32>
    %22 = arith.subf %20, %21 : vector<1x8x128xf32>
    %23 = math.absf %22 : vector<1x8x128xf32>
    %24 = arith.addf %17, %23 : vector<1x8x128xf32>
    %cst_11 = arith.constant 1.000000e+00 : f32
    %25 = vector.broadcast %cst_11 : f32 to vector<1x8x128xf32>
    %26 = arith.mulf %25, %24 : vector<1x8x128xf32>
    %27 = arith.addf %2, %26 : vector<1x8x128xf32>
    %c0_12 = arith.constant 0 : index
    %c0_13 = arith.constant 0 : index
    %c0_14 = arith.constant 0 : index
    %28 = vector.load %arg5[%c0_12, %c0_13, %c0_14] : memref<1x8x128xf32, #tpu.memory_space<vmem>>, vector<1x8x128xf32>
    tpu.vector_store %arg5[%c0_12, %c0_13, %c0_14], %27 {strides = array<i32>} : memref<1x8x128xf32, #tpu.memory_space<vmem>>, vector<1x8x128xf32>,
    return
  }
  func.func @transform_0(%arg0: i32) -> (i32, i32, i32) {
    %c0_i32 = arith.constant 0 : i32
    %c0_i32_0 = arith.constant 0 : i32
    %c0_i32_1 = arith.constant 0 : i32
    return %arg0, %c0_i32, %c0_i32_0 : i32, i32, i32
  }
  func.func @transform_1(%arg0: i32) -> (i32, i32, i32) {
    %c0_i32 = arith.constant 0 : i32
    %c0_i32_0 = arith.constant 0 : i32
    %c0_i32_1 = arith.constant 0 : i32
    return %arg0, %c0_i32, %c0_i32_0 : i32, i32, i32
  }
  func.func @transform_2(%arg0: i32) -> (i32, i32, i32) {
    %c0_i32 = arith.constant 0 : i32
    %c0_i32_0 = arith.constant 0 : i32
    %c0_i32_1 = arith.constant 0 : i32
    return %arg0, %c0_i32, %c0_i32_0 : i32, i32, i32
  }
  func.func @transform_3(%arg0: i32) -> (i32, i32, i32) {
    %c0_i32 = arith.constant 0 : i32
    %c0_i32_0 = arith.constant 0 : i32
    %c0_i32_1 = arith.constant 0 : i32
    return %arg0, %c0_i32, %c0_i32_0 : i32, i32, i32
  }
  func.func @transform_4(%arg0: i32) -> (i32, i32, i32) {
    %c0_i32 = arith.constant 0 : i32
    %c0_i32_0 = arith.constant 0 : i32
    %c0_i32_1 = arith.constant 0 : i32
    return %arg0, %c0_i32, %c0_i32_0 : i32, i32, i32
  }
}

</mosaic_0001>

<llo_original>
// kernel: tpu_custom_call.1
$region0: #{tpu_custom_call.1}
  #allocation0 [shape = 'u32[]', space=smem, size = 0x4, offset = 0x4, fixed_abs, tag = 'smem constant byte address 0x4 - core index']
  #allocation1 [shape = 'u32[144,128]{1,0:T(1,128)}', space=vmem, size = 0x12000, scoped, tag = 'internal scratch']
  %s0 = inlined_call_operand.vmem [shape: f32[2,8,15], index: 0, kind: input, shape index: {}]
  %s1 = inlined_call_operand.vmem [shape: f32[2,15,128], index: 1, kind: input, shape index: {}]
  %s2 = inlined_call_operand.vmem [shape: f32[2,8,3], index: 2, kind: input, shape index: {}]
  %s3 = inlined_call_operand.vmem [shape: f32[2,3,128], index: 3, kind: input, shape index: {}]
  %s4 = inlined_call_operand.hbm [shape: f32[2,8,128], index: 4, kind: output, shape index: {}]
  %s5 = sld [smem:[#allocation0]]
  $region49: #{tpu_custom_call.1} parent=0
    _
  %s7 = ssub.s32 1, %s5
  %s8 = scalar_select 0, %s7, %s5
  $region1: #{tpu_custom_call.1} parent=0
    #allocation2 [shape = 'u8[8192]{0}', space=vmem, size = 0x2000, scoped, tag = 'output window, operand 0']
    #allocation3 [shape = 's32[2]{0}', space=sflag, size = 0x8, scoped, tag = 'scoped memory for tpu_custom_call.1']
    %9 = vsyncpa [#allocation3], 0
    %s10 = scalar_lea.sflag [#allocation3], 1
    %11 = vsyncpa %s10, 0
    loop: start=0, step=1, limit=4
    $region2: #{tpu_custom_call.1} parent=1 // loop_pre_header
      _
    $region3: #{tpu_custom_call.1} parent=1 // loop_header
      %s13 = sphi 0, %s17
      %p14 = scmp.ge.s32.totalorder %s13, 4
      %s23 = sphi 0, %s25
      %s26 = sphi 0, %s23
      %s27 = sphi 0, %s26
      %s43 = sphi 0, %s27
      %s49 = sphi 0, %s51
      %s52 = sphi 0, %s49
      %s53 = sphi 0, %s52
      %s69 = sphi 0, %s53
      %s75 = sphi 0, %s77
      %s78 = sphi 0, %s75
      %s79 = sphi 0, %s78
      %s95 = sphi 0, %s79
      %s101 = sphi 0, %s103
      %s104 = sphi 0, %s101
      %s105 = sphi 0, %s104
      %s121 = sphi 0, %s105
      %s127 = sphi 0, %s129
      %s130 = sphi 0, %s127
      %s131 = sphi 0, %s130
      %s147 = sphi 0, %s131
    $region4: #{tpu_custom_call.1} parent=1 // loop_header_branch
      %16 = sbr.rel (%p14) target = $region8
    $region5: #{tpu_custom_call.1} parent=1 // loop_body
      %s18 = ssub.s32 %s13, 1
      %s19 = ssub.s32 %s13, 2
      %s20 = sadd.s32 %s13, 1
      %s21 = ssub.s32 %s13, %s20
      %p22 = scmp.eq.s32.totalorder %s21, 0
      %s24 = sadd.s32 %s23, 1
      %s25 = scalar_select %p22, %s23, %s24
      %p28 = pneg %p22
      %p29 = scmp.eq.s32.totalorder %s13, 1
      %p30 = por %p28, %p29
      %p31 = scmp.ne.s32.totalorder %s23, %s26
      %p32 = scmp.eq.s32.totalorder %s13, 0
      %p33 = por %p31, %p32
      %p34 = scmp.ne.s32.totalorder %s23, %s26
      %p35 = scmp.eq.s32.totalorder %s18, 1
      %p36 = por %p34, %p35
      %p37 = scmp.ne.s32.totalorder %s26, %s27
      %p38 = scmp.eq.s32.totalorder %s18, 0
      %p39 = por %p37, %p38
      %p40 = scmp.ne.s32.totalorder %s26, %s27
      %p41 = scmp.eq.s32.totalorder %s19, 1
      %p42 = por %p40, %p41
      %p44 = scmp.ne.s32.totalorder %s27, %s43
      %p45 = scmp.eq.s32.totalorder %s19, 0
      %p46 = por %p44, %p45
      %s47 = ssub.s32 %s13, %s20
      %p48 = scmp.eq.s32.totalorder %s47, 0
      %s50 = sadd.s32 %s49, 1
      %s51 = scalar_select %p48, %s49, %s50
      %p54 = pneg %p48
      %p55 = scmp.eq.s32.totalorder %s13, 1
      %p56 = por %p54, %p55
      %p57 = scmp.ne.s32.totalorder %s49, %s52
      %p58 = scmp.eq.s32.totalorder %s13, 0
      %p59 = por %p57, %p58
      %p60 = scmp.ne.s32.totalorder %s49, %s52
      %p61 = scmp.eq.s32.totalorder %s18, 1
      %p62 = por %p60, %p61
      %p63 = scmp.ne.s32.totalorder %s52, %s53
      %p64 = scmp.eq.s32.totalorder %s18, 0
      %p65 = por %p63, %p64
      %p66 = scmp.ne.s32.totalorder %s52, %s53
      %p67 = scmp.eq.s32.totalorder %s19, 1
      %p68 = por %p66, %p67
      %p70 = scmp.ne.s32.totalorder %s53, %s69
      %p71 = scmp.eq.s32.totalorder %s19, 0
      %p72 = por %p70, %p71
      %s73 = ssub.s32 %s13, %s20
      %p74 = scmp.eq.s32.totalorder %s73, 0
      %s76 = sadd.s32 %s75, 1
      %s77 = scalar_select %p74, %s75, %s76
      %p80 = pneg %p74
      %p81 = scmp.eq.s32.totalorder %s13, 1
      %p82 = por %p80, %p81
      %p83 = scmp.ne.s32.totalorder %s75, %s78
      %p84 = scmp.eq.s32.totalorder %s13, 0
      %p85 = por %p83, %p84
      %p86 = scmp.ne.s32.totalorder %s75, %s78
      %p87 = scmp.eq.s32.totalorder %s18, 1
      %p88 = por %p86, %p87
      %p89 = scmp.ne.s32.totalorder %s78, %s79
      %p90 = scmp.eq.s32.totalorder %s18, 0
      %p91 = por %p89, %p90
      %p92 = scmp.ne.s32.totalorder %s78, %s79
      %p93 = scmp.eq.s32.totalorder %s19, 1
      %p94 = por %p92, %p93
      %p96 = scmp.ne.s32.totalorder %s79, %s95
      %p97 = scmp.eq.s32.totalorder %s19, 0
      %p98 = por %p96, %p97
      %s99 = ssub.s32 %s13, %s20
      %p100 = scmp.eq.s32.totalorder %s99, 0
      %s102 = sadd.s32 %s101, 1
      %s103 = scalar_select %p100, %s101, %s102
      %p106 = pneg %p100
      %p107 = scmp.eq.s32.totalorder %s13, 1
      %p108 = por %p106, %p107
      %p109 = scmp.ne.s32.totalorder %s101, %s104
      %p110 = scmp.eq.s32.totalorder %s13, 0
      %p111 = por %p109, %p110
      %p112 = scmp.ne.s32.totalorder %s101, %s104
      %p113 = scmp.eq.s32.totalorder %s18, 1
      %p114 = por %p112, %p113
      %p115 = scmp.ne.s32.totalorder %s104, %s105
      %p116 = scmp.eq.s32.totalorder %s18, 0
      %p117 = por %p115, %p116
      %p118 = scmp.ne.s32.totalorder %s104, %s105
      %p119 = scmp.eq.s32.totalorder %s19, 1
      %p120 = por %p118, %p119
      %p122 = scmp.ne.s32.totalorder %s105, %s121
      %p123 = scmp.eq.s32.totalorder %s19, 0
      %p124 = por %p122, %p123
      %s125 = ssub.s32 %s13, %s20
      %p126 = scmp.eq.s32.totalorder %s125, 0
      %s128 = sadd.s32 %s127, 1
      %s129 = scalar_select %p126, %s127, %s128
      %p132 = pneg %p126
      %p133 = scmp.eq.s32.totalorder %s13, 1
      %p134 = por %p132, %p133
      %p135 = scmp.ne.s32.totalorder %s127, %s130
      %p136 = scmp.eq.s32.totalorder %s13, 0
      %p137 = por %p135, %p136
      %p138 = scmp.ne.s32.totalorder %s127, %s130
      %p139 = scmp.eq.s32.totalorder %s18, 1
      %p140 = por %p138, %p139
      %p141 = scmp.ne.s32.totalorder %s130, %s131
      %p142 = scmp.eq.s32.totalorder %s18, 0
      %p143 = por %p141, %p142
      %p144 = scmp.ne.s32.totalorder %s130, %s131
      %p145 = scmp.eq.s32.totalorder %s19, 1
      %p146 = por %p144, %p145
      %p148 = scmp.ne.s32.totalorder %s131, %s147
      %p149 = scmp.eq.s32.totalorder %s19, 0
      %p150 = por %p148, %p149
      %p151 = scmp.le.s32.totalorder 1, %s13
      %p152 = scmp.lt.s32.totalorder %s13, 3
      %p153 = pnand %p151, %p152
      %p154 = pneg %p153
      // Predicated region
      $region9: #{tpu_custom_call.1} parent=5 // pred_check
        _
      $region10: #{tpu_custom_call.1} parent=5 // pred_check_branch
        %156 = sbr.rel (%p153) target = $region12
      $region11: #{tpu_custom_call.1} parent=5 // pred_region
        %s157 = ssub.s32 %s13, 1
      $region12: #{tpu_custom_call.1} parent=5 // pred_fallthru
        _
      %p158 = scmp.lt.s32.totalorder %s13, 2
      // Predicated region
      $region13: #{tpu_custom_call.1} parent=5 // pred_check
        %p159 = pneg %p158
      $region14: #{tpu_custom_call.1} parent=5 // pred_check_branch
        %161 = sbr.rel (%p159) target = $region16
      $region15: #{tpu_custom_call.1} parent=5 // pred_region
        // Predicated region
        $region17: #{tpu_custom_call.1} parent=15 // pred_check
          %p162 = pneg %p33
        $region18: #{tpu_custom_call.1} parent=15 // pred_check_branch
          %164 = sbr.rel (%p162) target = $region20
        $region19: #{tpu_custom_call.1} parent=15 // pred_region
          %p165 = scmp.lt.s32.totalorder %s13, 1
          %s166 = scalar_select %p165, %s13, 1
          %s167 = smul.addr %s166, 8
          %s168 = scalar_lea.vmem %s0, %s167
        $region20: #{tpu_custom_call.1} parent=15 // pred_fallthru
          _
        // Predicated region
        $region21: #{tpu_custom_call.1} parent=15 // pred_check
          %p169 = pneg %p59
        $region22: #{tpu_custom_call.1} parent=15 // pred_check_branch
          %171 = sbr.rel (%p169) target = $region24
        $region23: #{tpu_custom_call.1} parent=15 // pred_region
          %p172 = scmp.lt.s32.totalorder %s13, 1
          %s173 = scalar_select %p172, %s13, 1
          %s174 = smul.addr %s173, 2
          %s175 = smul.addr %s174, 8
          %s176 = scalar_lea.vmem %s1, %s175
        $region24: #{tpu_custom_call.1} parent=15 // pred_fallthru
          _
        // Predicated region
        $region25: #{tpu_custom_call.1} parent=15 // pred_check
          %p177 = pneg %p85
        $region26: #{tpu_custom_call.1} parent=15 // pred_check_branch
          %179 = sbr.rel (%p177) target = $region28
        $region27: #{tpu_custom_call.1} parent=15 // pred_region
          %p180 = scmp.lt.s32.totalorder %s13, 1
          %s181 = scalar_select %p180, %s13, 1
          %s182 = smul.addr %s181, 8
          %s183 = scalar_lea.vmem %s2, %s182
        $region28: #{tpu_custom_call.1} parent=15 // pred_fallthru
          _
        // Predicated region
        $region29: #{tpu_custom_call.1} parent=15 // pred_check
          %p184 = pneg %p111
        $region30: #{tpu_custom_call.1} parent=15 // pred_check_branch
          %186 = sbr.rel (%p184) target = $region32
        $region31: #{tpu_custom_call.1} parent=15 // pred_region
          %p187 = scmp.lt.s32.totalorder %s13, 1
          %s188 = scalar_select %p187, %s13, 1
          %s189 = smul.addr %s188, 4
          %s190 = scalar_lea.vmem %s3, %s189
        $region32: #{tpu_custom_call.1} parent=15 // pred_fallthru
          _
      $region16: #{tpu_custom_call.1} parent=5 // pred_fallthru
        _
      %p191 = scmp.le.s32.totalorder 1, %s13
      %p192 = scmp.lt.s32.totalorder %s13, 3
      %p193 = pnand %p191, %p192
      %p194 = pneg %p193
      // Predicated region
      $region33: #{tpu_custom_call.1} parent=5 // pred_check
        _
      $region34: #{tpu_custom_call.1} parent=5 // pred_check_branch
        %196 = sbr.rel (%p193) target = $region36
      $region35: #{tpu_custom_call.1} parent=5 // pred_region
        %s197 = ssub.s32 %s13, 1
        %p198 = scmp.lt.s32.totalorder %s18, 1
        %s199 = scalar_select %p198, %s18, 1
        %s200 = smul.addr %s199, 8
        %s201 = scalar_lea.vmem %s0, %s200
        %p202 = pneg %p39
        %p203 = pneg %p36
        %p204 = scmp.lt.s32.totalorder %s18, 1
        %s205 = scalar_select %p204, %s18, 1
        %s206 = smul.addr %s205, 2
        %s207 = smul.addr %s206, 8
        %s208 = scalar_lea.vmem %s1, %s207
        %p209 = pneg %p65
        %p210 = pneg %p62
        %p211 = scmp.lt.s32.totalorder %s18, 1
        %s212 = scalar_select %p211, %s18, 1
        %s213 = smul.addr %s212, 8
        %s214 = scalar_lea.vmem %s2, %s213
        %p215 = pneg %p91
        %p216 = pneg %p88
        %p217 = scmp.lt.s32.totalorder %s18, 1
        %s218 = scalar_select %p217, %s18, 1
        %s219 = smul.addr %s218, 4
        %s220 = scalar_lea.vmem %s3, %s219
        %p221 = pneg %p117
        %p222 = pneg %p114
        %p223 = pneg %p143
        %p224 = pneg %p140
        %s225 = sand.u32 %s130, 1
        %s226 = scalar_lea.sflag [#allocation3], %s225
        %s227 = sand.u32 %s130, 1
        %s228 = smul.addr %s227, 8
        %s229 = scalar_lea.vmem [#allocation2], %s228
        %p230 = scmp.lt.s32.totalorder %s18, 1
        %s231 = scalar_select %p230, %s18, 1
        %s232 = smul.addr %s231, 8
        %s233 = scalar_lea.vmem %s0, %s232
        %p234 = scmp.lt.s32.totalorder %s18, 1
        %s235 = scalar_select %p234, %s18, 1
        %s236 = smul.addr %s235, 2
        %s237 = smul.addr %s236, 8
        %s238 = scalar_lea.vmem %s1, %s237
        %p239 = scmp.lt.s32.totalorder %s18, 1
        %s240 = scalar_select %p239, %s18, 1
        %s241 = smul.addr %s240, 8
        %s242 = scalar_lea.vmem %s2, %s241
        %p243 = scmp.lt.s32.totalorder %s18, 1
        %s244 = scalar_select %p243, %s18, 1
        %s245 = smul.addr %s244, 4
        %s246 = scalar_lea.vmem %s3, %s245
        %v247 = vld [vmem:[%s233] sm:$0xff]
        %v248 = vld [vmem:[%s238] sm:$0xff]
        %v249 = vld [vmem:[%s238 + $0x8] sm:$0x7f]
        %v250 = vld [vmem:[%s242] sm:$0xff]
        %v251 = vld [vmem:[%s246] sm:$0x7]
        %253 = vset.pattern.permute.xlu0 0
        %254 = vperm.xlu0 %253, %v250
        %v255 = vpop.permute.xlu0 %254
        %v257 = vlaneseq
        %v258 = vshrl.u32 %v257, 7
        %v259 = vsub.s32 0, %v258
        %v260 = vrot.slane %v251, %v259
        %v261 = vsub.f32 %v255, %v260
        %v262 = vand.u32 2147483647, %v261
        %263 = vset.pattern.permute.xlu0 1
        %264 = vperm.xlu0 %263, %v250
        %v265 = vpop.permute.xlu0 %264
        %v267 = vlaneseq
        %v268 = vshrl.u32 %v267, 7
        %v269 = vsub.s32 1, %v268
        %v270 = vrot.slane %v251, %v269
        %v271 = vsub.f32 %v265, %v270
        %v272 = vand.u32 2147483647, %v271
        %v273 = vadd.f32 %v262, %v272
        %274 = vset.pattern.permute.xlu0 2
        %275 = vperm.xlu0 %274, %v250
        %v276 = vpop.permute.xlu0 %275
        %v278 = vlaneseq
        %v279 = vshrl.u32 %v278, 7
        %v280 = vsub.s32 2, %v279
        %v281 = vrot.slane %v251, %v280
        %v282 = vsub.f32 %v276, %v281
        %v283 = vand.u32 2147483647, %v282
        %v284 = vadd.f32 %v273, %v283
        %vm285 = vcmask 121856
        %v287 = vsel %vm285, %v247, 0
        %vm289 = vcmask 1046528
        %v291 = vsel %vm289, %v249, 0
        %293 = vmatprep.subr.mxu0 0.0
        %294 = vmatpush1.msra.mxu0 %v248
        %295 = vmatprep.subr.mxu0 0.0
        %296 = vmatpush1.msra.mxu0 %v291
        %297 = vmatprep.subr.mxu0 0.0
        %298 = vmatpush1.msra.mxu0 0.0
        %299 = vmatprep.subr.mxu0 0.0
        %300 = vmatpush1.msra.mxu0 0.0
        %301 = vmatprep.subr.mxu0 0.0
        %302 = vmatpush1.msra.mxu0 0.0
        %303 = vmatprep.subr.mxu0 0.0
        %304 = vmatpush1.msra.mxu0 0.0
        %305 = vmatprep.subr.mxu0 0.0
        %306 = vmatpush1.msra.mxu0 0.0
        %307 = vmatprep.subr.mxu0 0.0
        %308 = vmatpush1.msra.mxu0 0.0
        %309 = vmatprep.subr.mxu0 0.0
        %310 = vmatpush1.msra.mxu0 0.0
        %311 = vmatprep.subr.mxu0 0.0
        %312 = vmatpush1.msra.mxu0 0.0
        %313 = vmatprep.subr.mxu0 0.0
        %314 = vmatpush1.msra.mxu0 0.0
        %315 = vmatprep.subr.mxu0 0.0
        %316 = vmatpush1.msra.mxu0 0.0
        %317 = vmatprep.subr.mxu0 0.0
        %318 = vmatpush1.msra.mxu0 0.0
        %319 = vmatprep.subr.mxu0 0.0
        %320 = vmatpush1.msra.mxu0 0.0
        %321 = vmatprep.subr.mxu0 0.0
        %322 = vmatpush1.msra.mxu0 0.0
        %323 = vmatprep.subr.mxu0 0.0
        %324 = vmatpush1.msra.mxu0 0.0
        %325 = vmatprep.subr.mxu0 0.0
        %326 = vmatpush1.msra.mxu0 0.0
        %327 = vmatprep.subr.mxu0 0.0
        %328 = vmatpush1.msra.mxu0 0.0
        %329 = vmatprep.subr.mxu0 0.0
        %330 = vmatpush1.msra.mxu0 0.0
        %331 = vmatprep.subr.mxu0 0.0
        %332 = vmatpush1.msra.mxu0 0.0
        %333 = vmatprep.subr.mxu0 0.0
        %334 = vmatpush1.msra.mxu0 0.0
        %335 = vmatprep.subr.mxu0 0.0
        %336 = vmatpush1.msra.mxu0 0.0
        %337 = vmatprep.subr.mxu0 0.0
        %338 = vmatpush1.msra.mxu0 0.0
        %339 = vmatprep.subr.mxu0 0.0
        %340 = vmatpush1.msra.mxu0 0.0
        %341 = vmatprep.subr.mxu0 0.0
        %342 = vmatpush1.msra.mxu0 0.0
        %343 = vmatprep.subr.mxu0 0.0
        %344 = vmatpush1.msra.mxu0 0.0
        %345 = vmatprep.subr.mxu0 0.0
        %346 = vmatpush1.msra.mxu0 0.0
        %347 = vmatprep.subr.mxu0 0.0
        %348 = vmatpush1.msra.mxu0 0.0
        %349 = vmatprep.subr.mxu0 0.0
        %350 = vmatpush1.msra.mxu0 0.0
        %351 = vmatprep.subr.mxu0 0.0
        %352 = vmatpush1.msra.mxu0 0.0
        %353 = vmatprep.subr.mxu0 0.0
        %354 = vmatpush1.msra.mxu0 0.0
        %355 = vmatprep.subr.mxu0 0.0
        %356 = vmatpush1.msra.mxu0 0.0
        %357 = vmatprep.mubr.f32.mxu0 0.0
        %358 = vmatmul.mubr.f32.gmra.mrb[0].mxu0 %v287
        %v359 = vpop.f32.mrb[0].mxu0
        %v360 = vadd.f32 %v284, %v359
        %v361 = vpop.f32.mrb[0].mxu0
        %362 = vdwg.mxu0
        %363 = vst [vmem:[%s229] sm:$0xff] %v360
        %s364 = sand.u32 %s130, 1
        %s365 = scalar_lea.sflag [#allocation3], %s364
        %s366 = sand.u32 %s130, 1
        %s367 = smul.addr %s366, 8
        %s368 = scalar_lea.vmem [#allocation2], %s367
        // Predicated region
        $region37: #{tpu_custom_call.1} parent=35 // pred_check
          %p369 = pneg %p140
        $region38: #{tpu_custom_call.1} parent=35 // pred_check_branch
          %371 = sbr.rel (%p369) target = $region40
        $region39: #{tpu_custom_call.1} parent=35 // pred_region
          %s373 = ssub.s32 128, 128
          %374 = vsyncadd %s365, %s373
          %s375 = smul.addr %s18, 128
          %s376 = scalar_lea.hbm %s4, %s375
          %s378 = sshll.u32 %s368, 4
          %s379 = int_to_ptr.vmem [resolvable:$true] %s378
          %381 = dma.vmem_to_hbm [thread:$0]  %s379, 128, %s376, %s365
        $region40: #{tpu_custom_call.1} parent=35 // pred_fallthru
          _
      $region36: #{tpu_custom_call.1} parent=5 // pred_fallthru
        _
      %p382 = scmp.le.s32.totalorder 2, %s13
      // Predicated region
      $region41: #{tpu_custom_call.1} parent=5 // pred_check
        %p383 = pneg %p382
      $region42: #{tpu_custom_call.1} parent=5 // pred_check_branch
        %385 = sbr.rel (%p383) target = $region44
      $region43: #{tpu_custom_call.1} parent=5 // pred_region
        %s386 = ssub.s32 %s13, 2
        // Predicated region
        $region45: #{tpu_custom_call.1} parent=43 // pred_check
          %p387 = pneg %p146
        $region46: #{tpu_custom_call.1} parent=43 // pred_check_branch
          %389 = sbr.rel (%p387) target = $region48
        $region47: #{tpu_custom_call.1} parent=43 // pred_region
          %s390 = sand.u32 %s131, 1
          %s391 = scalar_lea.sflag [#allocation3], %s390
          %s392 = sand.u32 %s131, 1
          %s393 = smul.addr %s392, 8
          %s394 = scalar_lea.vmem [#allocation2], %s393
          %395 = dma.done %s391, 128
        $region48: #{tpu_custom_call.1} parent=43 // pred_fallthru
          _
      $region44: #{tpu_custom_call.1} parent=5 // pred_fallthru
        _
    $region6: #{tpu_custom_call.1} parent=1 // loop_footer
      %s17 = sadd.s32 1, %s13
    $region7: #{tpu_custom_call.1} parent=1 // loop_footer_branch
      %12 = sbr.rel target = $region3
    $region8: #{tpu_custom_call.1} parent=1 // loop_exit
      _
    %396 = vsyncpa [#allocation3], 1
    %s397 = scalar_lea.sflag [#allocation3], 1
    %398 = vsyncpa %s397, 1

</llo_original>
